<compile_context>
chip_gen: v7x
topology: tpu7x:2x2x1
jax: 0.10.0
libtpu: 0.0.40
codegen_flags: <defaults>
</compile_context>

<pallas_src>
import functools

import jax
import jax.numpy as jnp
from jax import lax
from jax.experimental import pallas as pl
from jax.experimental.pallas import tpu as pltpu


def _project_kernel(apply_input_relu, x_ref, w_ref, adst_ref, xw_ref, alphad_ref):
    """Row tile: xw = (relu?)(x) @ W ; alpha_dst = xw @ A_dst."""
    x = x_ref[...]                                    # bf16 row tile
    if apply_input_relu:                              # fused inter-layer F.relu
        x = jnp.maximum(x, 0)
    xw = jnp.dot(x.astype(jnp.bfloat16), w_ref[...],
                 preferred_element_type=jnp.float32)                 # (TM, HC)
    alphad_ref[...] = jnp.dot(xw, adst_ref[...],
                              preferred_element_type=jnp.float32)    # (TM, H)
    xw_ref[...] = xw.astype(jnp.bfloat16)


def _attention_kernel(H, C, slope,
                      blk_ref, adst_ref, asrc_ref, xw_ref, bias_ref, adj_ref,
                      out_ref, m_sc, l_sc, acc_sc):
    """(row tile i, source tile j): online-softmax GAT aggregation, all heads."""
    i = pl.program_id(0)
    j = pl.program_id(1)
    n_src = pl.num_programs(1)

    @pl.when(j == 0)
    def _init():
        m_sc[...] = jnp.full(m_sc.shape, -1e30, jnp.float32)
        l_sc[...] = jnp.zeros(l_sc.shape, jnp.float32)
        acc_sc[...] = jnp.zeros(acc_sc.shape, jnp.float32)

    @pl.when(blk_ref[i, j] > 0)          # skip blocks with no edges entirely
    def _compute():
        adj_m = adj_ref[...] > 0                        # (TM, TN) bool, hoisted
        xw = xw_ref[...]                                # (TN, HC) bf16
        # Source logits for this tile, all heads at once: (H, TN) on the MXU.
        a_srcT = lax.dot_general(asrc_ref[...], xw,
                                 (((1,), (1,)), ((), ())),
                                 preferred_element_type=jnp.float32)
        a_dst = adst_ref[...]                           # (TM, H) f32
        for h in range(H):                              # H is small & static
            e = a_dst[:, h:h + 1] + a_srcT[h:h + 1, :]          # (TM, TN)
            e = jnp.maximum(e, slope * e)                        # LeakyReLU(0.2)
            m_prev = m_sc[:, h:h + 1]
            m_new = jnp.maximum(m_prev, jnp.max(e, axis=-1, keepdims=True))
            corr = jnp.exp(m_prev - m_new)
            p = jnp.where(adj_m, jnp.exp(e - m_new), 0.0)        # multiplicative mask
            l_sc[:, h:h + 1] = corr * l_sc[:, h:h + 1] + jnp.sum(
                p, axis=-1, keepdims=True)
            acc_sc[:, h * C:(h + 1) * C] = (
                corr * acc_sc[:, h * C:(h + 1) * C]
                + jnp.dot(p.astype(jnp.bfloat16), xw[:, h * C:(h + 1) * C],
                          preferred_element_type=jnp.float32))
            m_sc[:, h:h + 1] = m_new

    @pl.when(j == n_src - 1)
    def _finalize():
        # Guard padded / edge-free rows (denominator would be 0 otherwise).
        l = jnp.maximum(l_sc[...], 1e-30)
        inv = pl.reciprocal(l, approx=False)            # off the hot loop: exact
        acc = acc_sc[...]
        outs = [acc[:, h * C:(h + 1) * C] * inv[:, h:h + 1] for h in range(H)]
        out = outs[0] if H == 1 else jnp.concatenate(outs, axis=-1)
        # Single lane-dense store of the whole (TM, HC) tile (+ bias).
        out_ref[...] = (out + bias_ref[...]).astype(out_ref.dtype)


def gat_conv(x, W, att_src, att_dst, bias, adj_i8, blk, *, heads, out_channels,
             apply_input_relu, out_dtype, negative_slope=0.2,
             row_tile=128, src_tile=512):
    """One dense GATConv layer on padded inputs (N_pad rows, int8 adjacency)."""
    N_pad, F_in = x.shape
    H, C = heads, out_channels
    HC = H * C
    TM, TN = row_tile, min(src_tile, N_pad)
    assert N_pad % TM == 0 and N_pad % TN == 0
    nR, nC = N_pad // TM, N_pad // TN
    assert blk.shape == (nR, nC)

    # Per-head attention vectors packed as dense matmul weights:
    #   A_src (H, HC): row h holds att_src[h] in cols [h*C, (h+1)*C)
    #   A_dst (HC, H): col h holds att_dst[h] in rows [h*C, (h+1)*C)
    A_src = jnp.zeros((H, HC), jnp.float32)
    A_dst = jnp.zeros((HC, H), jnp.float32)
    for h in range(H):
        A_src = A_src.at[h, h * C:(h + 1) * C].set(att_src[h].astype(jnp.float32))
        A_dst = A_dst.at[h * C:(h + 1) * C, h].set(att_dst[h].astype(jnp.float32))

    def cparams(sem):
        # Explicit VMEM budget: comfortably above the few MiB these tiles need,
        # and below v7x's 64 MiB physical per-TensorCore VMEM.
        return pltpu.CompilerParams(dimension_semantics=sem,
                                    vmem_limit_bytes=48 * 1024 * 1024)

    # ---- 1) projection ------------------------------------------------------
    proj = functools.partial(_project_kernel, apply_input_relu)
    xw, alpha_dst = pl.pallas_call(
        proj,
        out_shape=(jax.ShapeDtypeStruct((N_pad, HC), jnp.bfloat16),
                   jax.ShapeDtypeStruct((N_pad, H), jnp.float32)),
        grid=(nR,),
        in_specs=[pl.BlockSpec((TM, F_in), lambda i: (i, 0)),   # x row tile (bf16)
                  pl.BlockSpec((F_in, HC), lambda i: (0, 0)),   # W (bf16)
                  pl.BlockSpec((HC, H), lambda i: (0, 0))],     # A_dst
        out_specs=(pl.BlockSpec((TM, HC), lambda i: (i, 0)),
                   pl.BlockSpec((TM, H), lambda i: (i, 0))),
        compiler_params=cparams(("parallel",)),
    )(x, W.astype(jnp.bfloat16), A_dst)

    # ---- 2) attention (source-tiled online softmax) -------------------------
    bias2d = bias.reshape(1, HC).astype(jnp.float32)
    attn = functools.partial(_attention_kernel, H, C, float(negative_slope))
    out = pl.pallas_call(
        attn,
        out_shape=jax.ShapeDtypeStruct((N_pad, HC), out_dtype),
        grid_spec=pltpu.PrefetchScalarGridSpec(
            num_scalar_prefetch=1,                      # blk table -> SMEM
            grid=(nR, nC),
            in_specs=[
                pl.BlockSpec((TM, H), lambda i, j, blk: (i, 0)),   # alpha_dst tile
                pl.BlockSpec((H, HC), lambda i, j, blk: (0, 0)),   # A_src (bf16)
                pl.BlockSpec((TN, HC), lambda i, j, blk: (j, 0)),  # xw source tile
                pl.BlockSpec((1, HC), lambda i, j, blk: (0, 0)),   # bias
                pl.BlockSpec((TM, TN), lambda i, j, blk: (i, j)),  # adj tile (int8)
            ],
            out_specs=pl.BlockSpec((TM, HC), lambda i, j, blk: (i, 0)),
            scratch_shapes=[pltpu.VMEM((TM, H), jnp.float32),      # running max
                            pltpu.VMEM((TM, H), jnp.float32),      # running denom
                            pltpu.VMEM((TM, HC), jnp.float32)],    # running acc
        ),
        compiler_params=cparams(("parallel", "arbitrary")),
    )(blk, alpha_dst, A_src.astype(jnp.bfloat16), xw, bias2d, adj_i8)
    return out


def gat_forward(x, adj, params, *, row_tile=128, src_tile=512):
    """conv1 (F_in -> 8, heads=8) -> ReLU -> conv2 (64 -> num_classes, heads=1)."""
    assert src_tile % row_tile == 0
    N = x.shape[0]
    pad_to = max(row_tile, src_tile)
    N_pad = ((N + pad_to - 1) // pad_to) * pad_to
    pad = N_pad - N

    # Inter-layer activations (and layer-1 input) stay in bf16.
    x_p = jnp.pad(x.astype(jnp.bfloat16), ((0, pad), (0, 0)))
    # Narrow the O(N^2) adjacency stream to int8 BEFORE padding.
    adj_i8 = jnp.pad(adj.astype(jnp.int8), ((0, pad), (0, pad)))

    # Per (row tile, source tile) "block has any edge" table (scalar prefetch).
    nR, nC = N_pad // row_tile, N_pad // src_tile
    blk = (adj_i8.reshape(nR, row_tile, nC, src_tile).max(axis=(1, 3)) > 0
           ).astype(jnp.int32)

    h = gat_conv(x_p, params["W1"], params["att_src1"], params["att_dst1"],
                 params["b1"], adj_i8, blk, heads=8, out_channels=8,
                 apply_input_relu=False, out_dtype=jnp.bfloat16,
                 row_tile=row_tile, src_tile=src_tile)
    num_classes = params["W2"].shape[1]
    out = gat_conv(h, params["W2"], params["att_src2"], params["att_dst2"],
                   params["b2"], adj_i8, blk, heads=1, out_channels=num_classes,
                   apply_input_relu=True, out_dtype=jnp.float32,
                   row_tile=row_tile, src_tile=src_tile)
    return out[:N]


if __name__ == "__main__":
    # Small synthetic graph: N nodes, F_in node features, num_classes outputs.
    N, F_IN, NUM_CLASSES = 64, 16, 8
    H1, C1 = 8, 8

    key = jax.random.PRNGKey(0)
    k_x, k_src, k_dst, k_w1, k_a1s, k_a1d, k_w2, k_a2s, k_a2d = (
        jax.random.split(key, 9))

    # Node features.
    x = jax.random.normal(k_x, (N, F_IN), dtype=jnp.float32)

    # Random edge_index (src -> dst) as a dense adjacency mask adj[dst, src]=1,
    # plus self-loops (GATConv add_self_loops=True).
    E = 256
    src = jax.random.randint(k_src, (E,), 0, N)
    dst = jax.random.randint(k_dst, (E,), 0, N)
    adj = jnp.zeros((N, N), jnp.float32).at[dst, src].set(1.0)
    adj = jnp.maximum(adj, jnp.eye(N, dtype=jnp.float32))

    # Deterministic parameter init (shapes from GATConv(F_IN, 8, heads=8) and
    # GATConv(64, NUM_CLASSES, heads=1)).
    params = {
        "W1": jax.random.normal(k_w1, (F_IN, H1 * C1), jnp.float32) / jnp.sqrt(F_IN),
        "att_src1": jax.random.normal(k_a1s, (H1, C1), jnp.float32) * 0.1,
        "att_dst1": jax.random.normal(k_a1d, (H1, C1), jnp.float32) * 0.1,
        "b1": jnp.zeros((H1 * C1,), jnp.float32),
        "W2": jax.random.normal(k_w2, (H1 * C1, NUM_CLASSES), jnp.float32) / jnp.sqrt(H1 * C1),
        "att_src2": jax.random.normal(k_a2s, (1, NUM_CLASSES), jnp.float32) * 0.1,
        "att_dst2": jax.random.normal(k_a2d, (1, NUM_CLASSES), jnp.float32) * 0.1,
        "b2": jnp.zeros((NUM_CLASSES,), jnp.float32),
    }

    out = gat_forward(x, adj, params)
    jax.block_until_ready(out)
    assert out.shape == (N, NUM_CLASSES) and out.dtype == jnp.float32
    assert bool(jnp.all(jnp.isfinite(out)))
    print("KERNEL_OK")
</pallas_src>

<mosaic_0001>
module attributes {stable_mosaic.version = 11 : i64} {
  func.func @_project_kernel(%arg0: i32, %arg1: memref<128x16xbf16, #tpu.memory_space<vmem>>, %arg2: memref<16x64xbf16, #tpu.memory_space<vmem>>, %arg3: memref<64x8xf32, #tpu.memory_space<vmem>>, %arg4: memref<128x64xbf16, #tpu.memory_space<vmem>>, %arg5: memref<128x8xf32, #tpu.memory_space<vmem>>) attributes {dimension_semantics = [#tpu.dimension_semantics<parallel>], iteration_bounds = array<i64: 4>, scalar_prefetch = 0 : i64, scratch_operands = 0 : i64, tpu.core_type = #tpu.core_type<tc>, window_params = [{transform_indices = @transform_0, window_bounds = array<i64: 128, 16>}, {pipeline_mode = #tpu.pipeline_mode<synchronous>, transform_indices = @transform_1, window_bounds = array<i64: 16, 64>}, {pipeline_mode = #tpu.pipeline_mode<synchronous>, transform_indices = @transform_2, window_bounds = array<i64: 64, 8>}, {transform_indices = @transform_3, window_bounds = array<i64: 128, 64>}, {transform_indices = @transform_4, window_bounds = array<i64: 128, 8>}]} {
    %c0 = arith.constant 0 : index
    %c0_0 = arith.constant 0 : index
    %0 = vector.load %arg1[%c0, %c0_0] : memref<128x16xbf16, #tpu.memory_space<vmem>>, vector<128x16xbf16>
    %c0_1 = arith.constant 0 : index
    %c0_2 = arith.constant 0 : index
    %1 = vector.load %arg2[%c0_1, %c0_2] : memref<16x64xbf16, #tpu.memory_space<vmem>>, vector<16x64xbf16>
    %cst = arith.constant dense<0.000000e+00> : vector<128x64xf32>
    %2 = tpu.matmul %0, %1, %cst {dimension_numbers = #tpu.dot_dimension_numbers<[1], [0], [0], [1], [0, 0, 1, 1], [], []>} : vector<128x16xbf16>, vector<16x64xbf16>, vector<128x64xf32> -> vector<128x64xf32>
    %c0_3 = arith.constant 0 : index
    %c0_4 = arith.constant 0 : index
    %3 = vector.load %arg3[%c0_3, %c0_4] : memref<64x8xf32, #tpu.memory_space<vmem>>, vector<64x8xf32>
    %cst_5 = arith.constant dense<0.000000e+00> : vector<128x8xf32>
    %4 = tpu.matmul %2, %3, %cst_5 {dimension_numbers = #tpu.dot_dimension_numbers<[1], [0], [0], [1], [0, 0, 1, 1], [], []>} : vector<128x64xf32>, vector<64x8xf32>, vector<128x8xf32> -> vector<128x8xf32>
    %c0_6 = arith.constant 0 : index
    %c0_7 = arith.constant 0 : index
    %5 = vector.load %arg5[%c0_6, %c0_7] : memref<128x8xf32, #tpu.memory_space<vmem>>, vector<128x8xf32>
    tpu.vector_store %arg5[%c0_6, %c0_7], %4 {strides = array<i32>} : memref<128x8xf32, #tpu.memory_space<vmem>>, vector<128x8xf32>,
    %6 = arith.truncf %2 : vector<128x64xf32> to vector<128x64xbf16>
    %c0_8 = arith.constant 0 : index
    %c0_9 = arith.constant 0 : index
    %7 = vector.load %arg4[%c0_8, %c0_9] : memref<128x64xbf16, #tpu.memory_space<vmem>>, vector<128x64xbf16>
    tpu.vector_store %arg4[%c0_8, %c0_9], %6 {strides = array<i32>} : memref<128x64xbf16, #tpu.memory_space<vmem>>, vector<128x64xbf16>,
    return
  }
  func.func @transform_0(%arg0: i32) -> (i32, i32) {
    %c0_i32 = arith.constant 0 : i32
    %c0_i32_0 = arith.constant 0 : i32
    return %arg0, %c0_i32 : i32, i32
  }
  func.func @transform_1(%arg0: i32) -> (i32, i32) {
    %c0_i32 = arith.constant 0 : i32
    %c0_i32_0 = arith.constant 0 : i32
    %c0_i32_1 = arith.constant 0 : i32
    return %c0_i32, %c0_i32_0 : i32, i32
  }
  func.func @transform_2(%arg0: i32) -> (i32, i32) {
    %c0_i32 = arith.constant 0 : i32
    %c0_i32_0 = arith.constant 0 : i32
    %c0_i32_1 = arith.constant 0 : i32
    return %c0_i32, %c0_i32_0 : i32, i32
  }
  func.func @transform_3(%arg0: i32) -> (i32, i32) {
    %c0_i32 = arith.constant 0 : i32
    %c0_i32_0 = arith.constant 0 : i32
    return %arg0, %c0_i32 : i32, i32
  }
  func.func @transform_4(%arg0: i32) -> (i32, i32) {
    %c0_i32 = arith.constant 0 : i32
    %c0_i32_0 = arith.constant 0 : i32
    return %arg0, %c0_i32 : i32, i32
  }
}

</mosaic_0001>

<llo_original>
// kernel: tpu_custom_call.1
$region0: #{tpu_custom_call.1}
  #allocation0 [shape = 'u32[]', space=smem, size = 0x4, offset = 0x4, fixed_abs, tag = 'smem constant byte address 0x4 - core index']
  #allocation1 [shape = 'u32[144,128]{1,0:T(1,128)}', space=vmem, size = 0x12000, scoped, tag = 'internal scratch']
  %s0 = inlined_call_operand.vmem [shape: bf16[512,16], index: 0, kind: input, shape index: {}]
  %s1 = inlined_call_operand.vmem [shape: bf16[16,64], index: 1, kind: input, shape index: {}]
  %s2 = inlined_call_operand.vmem [shape: f32[64,8], index: 2, kind: input, shape index: {}]
  %s3 = inlined_call_operand.vmem [shape: bf16[512,64], index: 3, kind: output, shape index: {0}]
  %s4 = inlined_call_operand.vmem [shape: f32[512,8], index: 4, kind: output, shape index: {1}]
  %5 = xla_tuple %s3, %s4
  %s6 = sld [smem:[#allocation0]]
  $region53: #{tpu_custom_call.1} parent=0
    _
  %s8 = ssub.s32 1, %s6
  %s9 = scalar_select 0, %s8, %s6
  loop: start=0, step=1, limit=6
  $region2: #{tpu_custom_call.1} parent=0 // loop_pre_header
    _
  $region3: #{tpu_custom_call.1} parent=0 // loop_header
    %s11 = sphi 0, %s15
    %p12 = scmp.ge.s32.totalorder %s11, 6
    %s21 = sphi 0, %s23
    %s24 = sphi 0, %s21
    %s25 = sphi 0, %s24
    %s41 = sphi 0, %s25
    %s45 = sphi 0, %s45
    %s47 = sphi 0, %s45
    %s48 = sphi 0, %s47
    %s62 = sphi 0, %s48
    %s66 = sphi 0, %s66
    %s68 = sphi 0, %s66
    %s69 = sphi 0, %s68
    %s83 = sphi 0, %s69
    %s89 = sphi 0, %s91
    %s92 = sphi 0, %s89
    %s93 = sphi 0, %s92
    %s109 = sphi 0, %s93
    %s115 = sphi 0, %s117
    %s118 = sphi 0, %s115
    %s119 = sphi 0, %s118
    %s135 = sphi 0, %s119
  $region4: #{tpu_custom_call.1} parent=0 // loop_header_branch
    %14 = sbr.rel (%p12) target = $region8
  $region5: #{tpu_custom_call.1} parent=0 // loop_body
    %s16 = ssub.s32 %s11, 1
    %s17 = ssub.s32 %s11, 2
    %s18 = sadd.s32 %s11, 1
    %s19 = ssub.s32 %s11, %s18
    %p20 = scmp.eq.s32.totalorder %s19, 0
    %s22 = sadd.s32 %s21, 1
    %s23 = scalar_select %p20, %s21, %s22
    %p26 = pneg %p20
    %p27 = scmp.eq.s32.totalorder %s11, 3
    %p28 = por %p26, %p27
    %p29 = scmp.ne.s32.totalorder %s21, %s24
    %p30 = scmp.eq.s32.totalorder %s11, 0
    %p31 = por %p29, %p30
    %p32 = scmp.ne.s32.totalorder %s21, %s24
    %p33 = scmp.eq.s32.totalorder %s16, 3
    %p34 = por %p32, %p33
    %p35 = scmp.ne.s32.totalorder %s24, %s25
    %p36 = scmp.eq.s32.totalorder %s16, 0
    %p37 = por %p35, %p36
    %p38 = scmp.ne.s32.totalorder %s24, %s25
    %p39 = scmp.eq.s32.totalorder %s17, 3
    %p40 = por %p38, %p39
    %p42 = scmp.ne.s32.totalorder %s25, %s41
    %p43 = scmp.eq.s32.totalorder %s17, 0
    %p44 = por %p42, %p43
    %s46 = sadd.s32 %s45, 1
    %p49 = scmp.eq.s32.totalorder %s11, 3
    %p50 = scmp.ne.s32.totalorder %s45, %s47
    %p51 = scmp.eq.s32.totalorder %s11, 0
    %p52 = por %p50, %p51
    %p53 = scmp.ne.s32.totalorder %s45, %s47
    %p54 = scmp.eq.s32.totalorder %s16, 3
    %p55 = por %p53, %p54
    %p56 = scmp.ne.s32.totalorder %s47, %s48
    %p57 = scmp.eq.s32.totalorder %s16, 0
    %p58 = por %p56, %p57
    %p59 = scmp.ne.s32.totalorder %s47, %s48
    %p60 = scmp.eq.s32.totalorder %s17, 3
    %p61 = por %p59, %p60
    %p63 = scmp.ne.s32.totalorder %s48, %s62
    %p64 = scmp.eq.s32.totalorder %s17, 0
    %p65 = por %p63, %p64
    %s67 = sadd.s32 %s66, 1
    %p70 = scmp.eq.s32.totalorder %s11, 3
    %p71 = scmp.ne.s32.totalorder %s66, %s68
    %p72 = scmp.eq.s32.totalorder %s11, 0
    %p73 = por %p71, %p72
    %p74 = scmp.ne.s32.totalorder %s66, %s68
    %p75 = scmp.eq.s32.totalorder %s16, 3
    %p76 = por %p74, %p75
    %p77 = scmp.ne.s32.totalorder %s68, %s69
    %p78 = scmp.eq.s32.totalorder %s16, 0
    %p79 = por %p77, %p78
    %p80 = scmp.ne.s32.totalorder %s68, %s69
    %p81 = scmp.eq.s32.totalorder %s17, 3
    %p82 = por %p80, %p81
    %p84 = scmp.ne.s32.totalorder %s69, %s83
    %p85 = scmp.eq.s32.totalorder %s17, 0
    %p86 = por %p84, %p85
    %s87 = ssub.s32 %s11, %s18
    %p88 = scmp.eq.s32.totalorder %s87, 0
    %s90 = sadd.s32 %s89, 1
    %s91 = scalar_select %p88, %s89, %s90
    %p94 = pneg %p88
    %p95 = scmp.eq.s32.totalorder %s11, 3
    %p96 = por %p94, %p95
    %p97 = scmp.ne.s32.totalorder %s89, %s92
    %p98 = scmp.eq.s32.totalorder %s11, 0
    %p99 = por %p97, %p98
    %p100 = scmp.ne.s32.totalorder %s89, %s92
    %p101 = scmp.eq.s32.totalorder %s16, 3
    %p102 = por %p100, %p101
    %p103 = scmp.ne.s32.totalorder %s92, %s93
    %p104 = scmp.eq.s32.totalorder %s16, 0
    %p105 = por %p103, %p104
    %p106 = scmp.ne.s32.totalorder %s92, %s93
    %p107 = scmp.eq.s32.totalorder %s17, 3
    %p108 = por %p106, %p107
    %p110 = scmp.ne.s32.totalorder %s93, %s109
    %p111 = scmp.eq.s32.totalorder %s17, 0
    %p112 = por %p110, %p111
    %s113 = ssub.s32 %s11, %s18
    %p114 = scmp.eq.s32.totalorder %s113, 0
    %s116 = sadd.s32 %s115, 1
    %s117 = scalar_select %p114, %s115, %s116
    %p120 = pneg %p114
    %p121 = scmp.eq.s32.totalorder %s11, 3
    %p122 = por %p120, %p121
    %p123 = scmp.ne.s32.totalorder %s115, %s118
    %p124 = scmp.eq.s32.totalorder %s11, 0
    %p125 = por %p123, %p124
    %p126 = scmp.ne.s32.totalorder %s115, %s118
    %p127 = scmp.eq.s32.totalorder %s16, 3
    %p128 = por %p126, %p127
    %p129 = scmp.ne.s32.totalorder %s118, %s119
    %p130 = scmp.eq.s32.totalorder %s16, 0
    %p131 = por %p129, %p130
    %p132 = scmp.ne.s32.totalorder %s118, %s119
    %p133 = scmp.eq.s32.totalorder %s17, 3
    %p134 = por %p132, %p133
    %p136 = scmp.ne.s32.totalorder %s119, %s135
    %p137 = scmp.eq.s32.totalorder %s17, 0
    %p138 = por %p136, %p137
    %p139 = scmp.le.s32.totalorder 1, %s11
    %p140 = scmp.lt.s32.totalorder %s11, 5
    %p141 = pnand %p139, %p140
    %p142 = pneg %p141
    // Predicated region
    $region9: #{tpu_custom_call.1} parent=5 // pred_check
      _
    $region10: #{tpu_custom_call.1} parent=5 // pred_check_branch
      %144 = sbr.rel (%p141) target = $region12
    $region11: #{tpu_custom_call.1} parent=5 // pred_region
      %s145 = ssub.s32 %s11, 1
      // Predicated region
      $region13: #{tpu_custom_call.1} parent=11 // pred_check
        %p146 = pneg %p58
      $region14: #{tpu_custom_call.1} parent=11 // pred_check_branch
        %148 = sbr.rel (%p146) target = $region16
      $region15: #{tpu_custom_call.1} parent=11 // pred_region
        _
      $region16: #{tpu_custom_call.1} parent=11 // pred_fallthru
        _
      // Predicated region
      $region17: #{tpu_custom_call.1} parent=11 // pred_check
        %p149 = pneg %p79
      $region18: #{tpu_custom_call.1} parent=11 // pred_check_branch
        %151 = sbr.rel (%p149) target = $region20
      $region19: #{tpu_custom_call.1} parent=11 // pred_region
        _
      $region20: #{tpu_custom_call.1} parent=11 // pred_fallthru
        _
    $region12: #{tpu_custom_call.1} parent=5 // pred_fallthru
      _
    %p152 = scmp.lt.s32.totalorder %s11, 4
    // Predicated region
    $region21: #{tpu_custom_call.1} parent=5 // pred_check
      %p153 = pneg %p152
    $region22: #{tpu_custom_call.1} parent=5 // pred_check_branch
      %155 = sbr.rel (%p153) target = $region24
    $region23: #{tpu_custom_call.1} parent=5 // pred_region
      // Predicated region
      $region25: #{tpu_custom_call.1} parent=23 // pred_check
        %p156 = pneg %p31
      $region26: #{tpu_custom_call.1} parent=23 // pred_check_branch
        %158 = sbr.rel (%p156) target = $region28
      $region27: #{tpu_custom_call.1} parent=23 // pred_region
        %s159 = smul.u32 16, %s11
        %p160 = scmp.lt.s32.totalorder %s159, 63
        %s161 = scalar_select %p160, %s159, 63
        %s162 = smul.addr %s161, 4
        %s163 = scalar_lea.vmem %s0, %s162
        %s164 = smul.u32 16, %s11
      $region28: #{tpu_custom_call.1} parent=23 // pred_fallthru
        _
    $region24: #{tpu_custom_call.1} parent=5 // pred_fallthru
      _
    %p165 = scmp.le.s32.totalorder 1, %s11
    %p166 = scmp.lt.s32.totalorder %s11, 5
    %p167 = pnand %p165, %p166
    %p168 = pneg %p167
    // Predicated region
    $region29: #{tpu_custom_call.1} parent=5 // pred_check
      _
    $region30: #{tpu_custom_call.1} parent=5 // pred_check_branch
      %170 = sbr.rel (%p167) target = $region32
    $region31: #{tpu_custom_call.1} parent=5 // pred_region
      %s171 = ssub.s32 %s11, 1
      %s172 = smul.u32 16, %s16
      %p173 = scmp.lt.s32.totalorder %s172, 63
      %s174 = scalar_select %p173, %s172, 63
      %s175 = smul.addr %s174, 4
      %s176 = scalar_lea.vmem %s0, %s175
      %p177 = pneg %p37
      %p178 = pneg %p34
      %p179 = pneg %p58
      %p180 = pneg %p55
      %p181 = pneg %p79
      %p182 = pneg %p76
      %p183 = pneg %p105
      %p184 = pneg %p102
      %s185 = smul.u32 16, %s16
      %p186 = scmp.lt.s32.totalorder %s185, 63
      %s187 = scalar_select %p186, %s185, 63
      %s188 = smul.addr %s187, 4
      %s189 = scalar_lea.vmem %s3, %s188
      %p190 = pneg %p131
      %p191 = pneg %p128
      %s192 = smul.u32 16, %s16
      %p193 = scmp.lt.s32.totalorder %s192, 63
      %s194 = scalar_select %p193, %s192, 63
      %s195 = smul.addr %s194, 8
      %s196 = scalar_lea.vmem %s4, %s195
      %s197 = smul.u32 16, %s16
      %p198 = scmp.lt.s32.totalorder %s197, 63
      %s199 = scalar_select %p198, %s197, 63
      %s200 = smul.addr %s199, 4
      %s201 = scalar_lea.vmem %s0, %s200
      %s202 = smul.u32 16, %s16
      %s203 = smul.u32 16, %s16
      %p204 = scmp.lt.s32.totalorder %s203, 63
      %s205 = scalar_select %p204, %s203, 63
      %s206 = smul.addr %s205, 4
      %s207 = scalar_lea.vmem %s3, %s206
      %s208 = smul.u32 16, %s16
      %s209 = smul.u32 16, %s16
      %p210 = scmp.lt.s32.totalorder %s209, 63
      %s211 = scalar_select %p210, %s209, 63
      %s212 = smul.addr %s211, 8
      %s213 = scalar_lea.vmem %s4, %s212
      %s214 = smul.u32 16, %s16
      %v216 = vld [vmem:[%s201] sm:$0xf]
      %v217 = vld [vmem:[%s201 + $0x4] sm:$0xf]
      %v218 = vld [vmem:[%s201 + $0x8] sm:$0xf]
      %v219 = vld [vmem:[%s201 + $0xc] sm:$0xf]
      %v220 = vld [vmem:[%s201 + $0x10] sm:$0xf]
      %v221 = vld [vmem:[%s201 + $0x14] sm:$0xf]
      %v222 = vld [vmem:[%s201 + $0x18] sm:$0xf]
      %v223 = vld [vmem:[%s201 + $0x1c] sm:$0xf]
      %v224 = vld [vmem:[%s201 + $0x20] sm:$0xf]
      %v225 = vld [vmem:[%s201 + $0x24] sm:$0xf]
      %v226 = vld [vmem:[%s201 + $0x28] sm:$0xf]
      %v227 = vld [vmem:[%s201 + $0x2c] sm:$0xf]
      %v228 = vld [vmem:[%s201 + $0x30] sm:$0xf]
      %v229 = vld [vmem:[%s201 + $0x34] sm:$0xf]
      %v230 = vld [vmem:[%s201 + $0x38] sm:$0xf]
      %v231 = vld [vmem:[%s201 + $0x3c] sm:$0xf]
      %v232 = vld [vmem:[%s1] sm:$0xf]
      %v233 = vld [vmem:[%s1 + $0x4] sm:$0xf]
      %v250 = vunpack.c.l.b16 %v216
      %v251 = vunpack.c.l.b16 %v217
      %v252 = vunpack.c.l.b16 %v218
      %v253 = vunpack.c.l.b16 %v219
      %v254 = vunpack.c.l.b16 %v220
      %v255 = vunpack.c.l.b16 %v221
      %v256 = vunpack.c.l.b16 %v222
      %v257 = vunpack.c.l.b16 %v223
      %v258 = vunpack.c.l.b16 %v224
      %v259 = vunpack.c.l.b16 %v225
      %v260 = vunpack.c.l.b16 %v226
      %v261 = vunpack.c.l.b16 %v227
      %v262 = vunpack.c.l.b16 %v228
      %v263 = vunpack.c.l.b16 %v229
      %v264 = vunpack.c.l.b16 %v230
      %v265 = vunpack.c.l.b16 %v231
      %v266 = vpack.c.b16 %v251, %v250
      %v267 = vpack.c.b16 %v253, %v252
      %v268 = vpack.c.b16 %v255, %v254
      %v269 = vpack.c.b16 %v257, %v256
      %v270 = vpack.c.b16 %v259, %v258
      %v271 = vpack.c.b16 %v261, %v260
      %v272 = vpack.c.b16 %v263, %v262
      %v273 = vpack.c.b16 %v265, %v264
      %v276 = vunpack.c.l.b16 %v232
      %v277 = vunpack.c.l.b16 %v233
      %v278 = vpack.c.b16 %v277, %v276
      %vm280 = vcmask 130048
      %v282 = vsel %vm280, %v266, 0
      %v285 = vsel %vm280, %v267, 0
      %v288 = vsel %vm280, %v268, 0
      %v291 = vsel %vm280, %v269, 0
      %v294 = vsel %vm280, %v270, 0
      %v297 = vsel %vm280, %v271, 0
      %v300 = vsel %vm280, %v272, 0
      %v303 = vsel %vm280, %v273, 0
      %305 = vmatprep.subr.bf16.mxu0 0
      %306 = vmatpush1.bf16.msra.mxu0 %v278
      %307 = vmatprep.subr.bf16.mxu0 0
      %308 = vmatpush1.bf16.msra.mxu0 0
      %309 = vmatprep.subr.bf16.mxu0 0
      %310 = vmatpush1.bf16.msra.mxu0 0
      %311 = vmatprep.subr.bf16.mxu0 0
      %312 = vmatpush1.bf16.msra.mxu0 0
      %313 = vmatprep.subr.bf16.mxu0 0
      %314 = vmatpush1.bf16.msra.mxu0 0
      %315 = vmatprep.subr.bf16.mxu0 0
      %316 = vmatpush1.bf16.msra.mxu0 0
      %317 = vmatprep.subr.bf16.mxu0 0
      %318 = vmatpush1.bf16.msra.mxu0 0
      %319 = vmatprep.subr.bf16.mxu0 0
      %320 = vmatpush1.bf16.msra.mxu0 0
      %321 = vmatprep.subr.bf16.mxu0 0
      %322 = vmatpush1.bf16.msra.mxu0 0
      %323 = vmatprep.subr.bf16.mxu0 0
      %324 = vmatpush1.bf16.msra.mxu0 0
      %325 = vmatprep.subr.bf16.mxu0 0
      %326 = vmatpush1.bf16.msra.mxu0 0
      %327 = vmatprep.subr.bf16.mxu0 0
      %328 = vmatpush1.bf16.msra.mxu0 0
      %329 = vmatprep.subr.bf16.mxu0 0
      %330 = vmatpush1.bf16.msra.mxu0 0
      %331 = vmatprep.subr.bf16.mxu0 0
      %332 = vmatpush1.bf16.msra.mxu0 0
      %333 = vmatprep.subr.bf16.mxu0 0
      %334 = vmatpush1.bf16.msra.mxu0 0
      %335 = vmatprep.subr.bf16.mxu0 0
      %336 = vmatpush1.bf16.msra.mxu0 0
      %337 = vmatprep.mubr.bf16.mxu0 0
      %338 = vmatmul.mubr.bf16.gmra.mrb[0].mxu0 %v282
      %v339 = vpop.f32.mrb[0].mxu0
      %v340 = vadd.f32 0.0, %v339
      %v341 = vpop.f32.mrb[0].mxu0
      %v342 = vpop.f32.mrb[0].mxu0
      %v343 = vadd.f32 0.0, %v342
      %v344 = vpop.f32.mrb[0].mxu0
      %345 = vmatprep.mubr.bf16.mxu0 0
      %346 = vmatmul.mubr.bf16.gmra.mrb[0].mxu0 %v285
      %v347 = vpop.f32.mrb[0].mxu0
      %v348 = vadd.f32 0.0, %v347
      %v349 = vpop.f32.mrb[0].mxu0
      %v350 = vpop.f32.mrb[0].mxu0
      %v351 = vadd.f32 0.0, %v350
      %v352 = vpop.f32.mrb[0].mxu0
      %353 = vmatprep.mubr.bf16.mxu0 0
      %354 = vmatmul.mubr.bf16.gmra.mrb[0].mxu0 %v288
      %v355 = vpop.f32.mrb[0].mxu0
      %v356 = vadd.f32 0.0, %v355
      %v357 = vpop.f32.mrb[0].mxu0
      %v358 = vpop.f32.mrb[0].mxu0
      %v359 = vadd.f32 0.0, %v358
      %v360 = vpop.f32.mrb[0].mxu0
      %361 = vmatprep.mubr.bf16.mxu0 0
      %362 = vmatmul.mubr.bf16.gmra.mrb[0].mxu0 %v291
      %v363 = vpop.f32.mrb[0].mxu0
      %v364 = vadd.f32 0.0, %v363
      %v365 = vpop.f32.mrb[0].mxu0
      %v366 = vpop.f32.mrb[0].mxu0
      %v367 = vadd.f32 0.0, %v366
      %v368 = vpop.f32.mrb[0].mxu0
      %369 = vmatprep.mubr.bf16.mxu0 0
      %370 = vmatmul.mubr.bf16.gmra.mrb[0].mxu0 %v294
      %v371 = vpop.f32.mrb[0].mxu0
      %v372 = vadd.f32 0.0, %v371
      %v373 = vpop.f32.mrb[0].mxu0
      %v374 = vpop.f32.mrb[0].mxu0
      %v375 = vadd.f32 0.0, %v374
      %v376 = vpop.f32.mrb[0].mxu0
      %377 = vmatprep.mubr.bf16.mxu0 0
      %378 = vmatmul.mubr.bf16.gmra.mrb[0].mxu0 %v297
      %v379 = vpop.f32.mrb[0].mxu0
      %v380 = vadd.f32 0.0, %v379
      %v381 = vpop.f32.mrb[0].mxu0
      %v382 = vpop.f32.mrb[0].mxu0
      %v383 = vadd.f32 0.0, %v382
      %v384 = vpop.f32.mrb[0].mxu0
      %385 = vmatprep.mubr.bf16.mxu0 0
      %386 = vmatmul.mubr.bf16.gmra.mrb[0].mxu0 %v300
      %v387 = vpop.f32.mrb[0].mxu0
      %v388 = vadd.f32 0.0, %v387
      %v389 = vpop.f32.mrb[0].mxu0
      %v390 = vpop.f32.mrb[0].mxu0
      %v391 = vadd.f32 0.0, %v390
      %v392 = vpop.f32.mrb[0].mxu0
      %393 = vmatprep.mubr.bf16.mxu0 0
      %394 = vmatmul.mubr.bf16.gmra.mrb[0].mxu0 %v303
      %v395 = vpop.f32.mrb[0].mxu0
      %v396 = vadd.f32 0.0, %v395
      %v397 = vpop.f32.mrb[0].mxu0
      %v398 = vpop.f32.mrb[0].mxu0
      %v399 = vadd.f32 0.0, %v398
      %v400 = vpop.f32.mrb[0].mxu0
      %401 = vdwg.mxu0
      %v402 = vld [vmem:[%s2] sm:$0xff]
      %v403 = vld [vmem:[%s2 + $0x8] sm:$0xff]
      %v404 = vld [vmem:[%s2 + $0x10] sm:$0xff]
      %v405 = vld [vmem:[%s2 + $0x18] sm:$0xff]
      %v406 = vld [vmem:[%s2 + $0x20] sm:$0xff]
      %v407 = vld [vmem:[%s2 + $0x28] sm:$0xff]
      %v408 = vld [vmem:[%s2 + $0x30] sm:$0xff]
      %v409 = vld [vmem:[%s2 + $0x38] sm:$0xff]
      %vm410 = vcmask 523264
      %v412 = vsel %vm410, %v340, 0
      %v415 = vsel %vm410, %v343, 0
      %v418 = vsel %vm410, %v348, 0
      %v421 = vsel %vm410, %v351, 0
      %v424 = vsel %vm410, %v356, 0
      %v427 = vsel %vm410, %v359, 0
      %v430 = vsel %vm410, %v364, 0
      %v433 = vsel %vm410, %v367, 0
      %v436 = vsel %vm410, %v372, 0
      %v439 = vsel %vm410, %v375, 0
      %v442 = vsel %vm410, %v380, 0
      %v445 = vsel %vm410, %v383, 0
      %v448 = vsel %vm410, %v388, 0
      %v451 = vsel %vm410, %v391, 0
      %v454 = vsel %vm410, %v396, 0
      %v457 = vsel %vm410, %v399, 0
      %459 = vmatprep.subr.mxu0 0.0
      %460 = vmatpush1.msra.mxu0 %v402
      %461 = vmatprep.subr.mxu0 0.0
      %462 = vmatpush1.msra.mxu0 %v403
      %463 = vmatprep.subr.mxu0 0.0
      %464 = vmatpush1.msra.mxu0 %v404
      %465 = vmatprep.subr.mxu0 0.0
      %466 = vmatpush1.msra.mxu0 %v405
      %467 = vmatprep.subr.mxu0 0.0
      %468 = vmatpush1.msra.mxu0 %v406
      %469 = vmatprep.subr.mxu0 0.0
      %470 = vmatpush1.msra.mxu0 %v407
      %471 = vmatprep.subr.mxu0 0.0
      %472 = vmatpush1.msra.mxu0 %v408
      %473 = vmatprep.subr.mxu0 0.0
      %474 = vmatpush1.msra.mxu0 %v409
      %475 = vmatprep.subr.mxu0 0.0
      %476 = vmatpush1.msra.mxu0 0.0
      %477 = vmatprep.subr.mxu0 0.0
      %478 = vmatpush1.msra.mxu0 0.0
      %479 = vmatprep.subr.mxu0 0.0
      %480 = vmatpush1.msra.mxu0 0.0
      %481 = vmatprep.subr.mxu0 0.0
      %482 = vmatpush1.msra.mxu0 0.0
      %483 = vmatprep.subr.mxu0 0.0
      %484 = vmatpush1.msra.mxu0 0.0
      %485 = vmatprep.subr.mxu0 0.0
      %486 = vmatpush1.msra.mxu0 0.0
      %487 = vmatprep.subr.mxu0 0.0
      %488 = vmatpush1.msra.mxu0 0.0
      %489 = vmatprep.subr.mxu0 0.0
      %490 = vmatpush1.msra.mxu0 0.0
      %491 = vmatprep.subr.mxu0 0.0
      %492 = vmatpush1.msra.mxu0 0.0
      %493 = vmatprep.subr.mxu0 0.0
      %494 = vmatpush1.msra.mxu0 0.0
      %495 = vmatprep.subr.mxu0 0.0
      %496 = vmatpush1.msra.mxu0 0.0
      %497 = vmatprep.subr.mxu0 0.0
      %498 = vmatpush1.msra.mxu0 0.0
      %499 = vmatprep.subr.mxu0 0.0
      %500 = vmatpush1.msra.mxu0 0.0
      %501 = vmatprep.subr.mxu0 0.0
      %502 = vmatpush1.msra.mxu0 0.0
      %503 = vmatprep.subr.mxu0 0.0
      %504 = vmatpush1.msra.mxu0 0.0
      %505 = vmatprep.subr.mxu0 0.0
      %506 = vmatpush1.msra.mxu0 0.0
      %507 = vmatprep.subr.mxu0 0.0
      %508 = vmatpush1.msra.mxu0 0.0
      %509 = vmatprep.subr.mxu0 0.0
      %510 = vmatpush1.msra.mxu0 0.0
      %511 = vmatprep.subr.mxu0 0.0
      %512 = vmatpush1.msra.mxu0 0.0
      %513 = vmatprep.subr.mxu0 0.0
      %514 = vmatpush1.msra.mxu0 0.0
      %515 = vmatprep.subr.mxu0 0.0
      %516 = vmatpush1.msra.mxu0 0.0
      %517 = vmatprep.subr.mxu0 0.0
      %518 = vmatpush1.msra.mxu0 0.0
      %519 = vmatprep.subr.mxu0 0.0
      %520 = vmatpush1.msra.mxu0 0.0
      %521 = vmatprep.subr.mxu0 0.0
      %522 = vmatpush1.msra.mxu0 0.0
      %523 = vmatprep.mubr.f32.mxu0 0.0
      %524 = vmatmul.mubr.f32.gmra.mrb[0].mxu0 %v412
      %v525 = vpop.f32.mrb[0].mxu0
      %v526 = vadd.f32 0.0, %v525
      %v527 = vpop.f32.mrb[0].mxu0
      %528 = vmatprep.mubr.f32.mxu0 0.0
      %529 = vmatmul.mubr.f32.gmra.mrb[0].mxu0 %v415
      %v530 = vpop.f32.mrb[0].mxu0
      %v531 = vadd.f32 0.0, %v530
      %v532 = vpop.f32.mrb[0].mxu0
      %533 = vmatprep.mubr.f32.mxu0 0.0
      %534 = vmatmul.mubr.f32.gmra.mrb[0].mxu0 %v418
      %v535 = vpop.f32.mrb[0].mxu0
      %v536 = vadd.f32 0.0, %v535
      %v537 = vpop.f32.mrb[0].mxu0
      %538 = vmatprep.mubr.f32.mxu0 0.0
      %539 = vmatmul.mubr.f32.gmra.mrb[0].mxu0 %v421
      %v540 = vpop.f32.mrb[0].mxu0
      %v541 = vadd.f32 0.0, %v540
      %v542 = vpop.f32.mrb[0].mxu0
      %543 = vmatprep.mubr.f32.mxu0 0.0
      %544 = vmatmul.mubr.f32.gmra.mrb[0].mxu0 %v424
      %v545 = vpop.f32.mrb[0].mxu0
      %v546 = vadd.f32 0.0, %v545
      %v547 = vpop.f32.mrb[0].mxu0
      %548 = vmatprep.mubr.f32.mxu0 0.0
      %549 = vmatmul.mubr.f32.gmra.mrb[0].mxu0 %v427
      %v550 = vpop.f32.mrb[0].mxu0
      %v551 = vadd.f32 0.0, %v550
      %v552 = vpop.f32.mrb[0].mxu0
      %553 = vmatprep.mubr.f32.mxu0 0.0
      %554 = vmatmul.mubr.f32.gmra.mrb[0].mxu0 %v430
      %v555 = vpop.f32.mrb[0].mxu0
      %v556 = vadd.f32 0.0, %v555
      %v557 = vpop.f32.mrb[0].mxu0
      %558 = vmatprep.mubr.f32.mxu0 0.0
      %559 = vmatmul.mubr.f32.gmra.mrb[0].mxu0 %v433
      %v560 = vpop.f32.mrb[0].mxu0
      %v561 = vadd.f32 0.0, %v560
      %v562 = vpop.f32.mrb[0].mxu0
      %563 = vmatprep.mubr.f32.mxu0 0.0
      %564 = vmatmul.mubr.f32.gmra.mrb[0].mxu0 %v436
      %v565 = vpop.f32.mrb[0].mxu0
      %v566 = vadd.f32 0.0, %v565
      %v567 = vpop.f32.mrb[0].mxu0
      %568 = vmatprep.mubr.f32.mxu0 0.0
      %569 = vmatmul.mubr.f32.gmra.mrb[0].mxu0 %v439
      %v570 = vpop.f32.mrb[0].mxu0
      %v571 = vadd.f32 0.0, %v570
      %v572 = vpop.f32.mrb[0].mxu0
      %573 = vmatprep.mubr.f32.mxu0 0.0
      %574 = vmatmul.mubr.f32.gmra.mrb[0].mxu0 %v442
      %v575 = vpop.f32.mrb[0].mxu0
      %v576 = vadd.f32 0.0, %v575
      %v577 = vpop.f32.mrb[0].mxu0
      %578 = vmatprep.mubr.f32.mxu0 0.0
      %579 = vmatmul.mubr.f32.gmra.mrb[0].mxu0 %v445
      %v580 = vpop.f32.mrb[0].mxu0
      %v581 = vadd.f32 0.0, %v580
      %v582 = vpop.f32.mrb[0].mxu0
      %583 = vmatprep.mubr.f32.mxu0 0.0
      %584 = vmatmul.mubr.f32.gmra.mrb[0].mxu0 %v448
      %v585 = vpop.f32.mrb[0].mxu0
      %v586 = vadd.f32 0.0, %v585
      %v587 = vpop.f32.mrb[0].mxu0
      %588 = vmatprep.mubr.f32.mxu0 0.0
      %589 = vmatmul.mubr.f32.gmra.mrb[0].mxu0 %v451
      %v590 = vpop.f32.mrb[0].mxu0
      %v591 = vadd.f32 0.0, %v590
      %v592 = vpop.f32.mrb[0].mxu0
      %593 = vmatprep.mubr.f32.mxu0 0.0
      %594 = vmatmul.mubr.f32.gmra.mrb[0].mxu0 %v454
      %v595 = vpop.f32.mrb[0].mxu0
      %v596 = vadd.f32 0.0, %v595
      %v597 = vpop.f32.mrb[0].mxu0
      %598 = vmatprep.mubr.f32.mxu0 0.0
      %599 = vmatmul.mubr.f32.gmra.mrb[0].mxu0 %v457
      %v600 = vpop.f32.mrb[0].mxu0
      %v601 = vadd.f32 0.0, %v600
      %v602 = vpop.f32.mrb[0].mxu0
      %603 = vdwg.mxu0
      %vm604 = vcmask 64512
      %605 = vst.msk [vmem:[%s213] sm:$0xff] %vm604, %v526
      %606 = vst.msk [vmem:[%s213 + $0x8] sm:$0xff] %vm604, %v531
      %607 = vst.msk [vmem:[%s213 + $0x10] sm:$0xff] %vm604, %v536
      %608 = vst.msk [vmem:[%s213 + $0x18] sm:$0xff] %vm604, %v541
      %609 = vst.msk [vmem:[%s213 + $0x20] sm:$0xff] %vm604, %v546
      %610 = vst.msk [vmem:[%s213 + $0x28] sm:$0xff] %vm604, %v551
      %611 = vst.msk [vmem:[%s213 + $0x30] sm:$0xff] %vm604, %v556
      %612 = vst.msk [vmem:[%s213 + $0x38] sm:$0xff] %vm604, %v561
      %613 = vst.msk [vmem:[%s213 + $0x40] sm:$0xff] %vm604, %v566
      %614 = vst.msk [vmem:[%s213 + $0x48] sm:$0xff] %vm604, %v571
      %615 = vst.msk [vmem:[%s213 + $0x50] sm:$0xff] %vm604, %v576
      %616 = vst.msk [vmem:[%s213 + $0x58] sm:$0xff] %vm604, %v581
      %617 = vst.msk [vmem:[%s213 + $0x60] sm:$0xff] %vm604, %v586
      %618 = vst.msk [vmem:[%s213 + $0x68] sm:$0xff] %vm604, %v591
      %619 = vst.msk [vmem:[%s213 + $0x70] sm:$0xff] %vm604, %v596
      %620 = vst.msk [vmem:[%s213 + $0x78] sm:$0xff] %vm604, %v601
      %v621 = vpack.c.bf16 %v343, %v340
      %v622 = vpack.c.bf16 %v351, %v348
      %v623 = vpack.c.bf16 %v359, %v356
      %v624 = vpack.c.bf16 %v367, %v364
      %v625 = vpack.c.bf16 %v375, %v372
      %v626 = vpack.c.bf16 %v383, %v380
      %v627 = vpack.c.bf16 %v391, %v388
      %v628 = vpack.c.bf16 %v399, %v396
      %v637 = vunpack.c.l.b16 %v621
      %v638 = vunpack.c.h.b16 %v621
      %v639 = vunpack.c.l.b16 %v622
      %v640 = vunpack.c.h.b16 %v622
      %v641 = vunpack.c.l.b16 %v623
      %v642 = vunpack.c.h.b16 %v623
      %v643 = vunpack.c.l.b16 %v624
      %v644 = vunpack.c.h.b16 %v624
      %v645 = vunpack.c.l.b16 %v625
      %v646 = vunpack.c.h.b16 %v625
      %v647 = vunpack.c.l.b16 %v626
      %v648 = vunpack.c.h.b16 %v626
      %v649 = vunpack.c.l.b16 %v627
      %v650 = vunpack.c.h.b16 %v627
      %v651 = vunpack.c.l.b16 %v628
      %v652 = vunpack.c.h.b16 %v628
      %v653 = vpack.c.b16 %v637, %v637
      %v654 = vpack.c.b16 %v638, %v638
      %v655 = vpack.c.b16 %v639, %v639
      %v656 = vpack.c.b16 %v640, %v640
      %v657 = vpack.c.b16 %v641, %v641
      %v658 = vpack.c.b16 %v642, %v642
      %v659 = vpack.c.b16 %v643, %v643
      %v660 = vpack.c.b16 %v644, %v644
      %v661 = vpack.c.b16 %v645, %v645
      %v662 = vpack.c.b16 %v646, %v646
      %v663 = vpack.c.b16 %v647, %v647
      %v664 = vpack.c.b16 %v648, %v648
      %v665 = vpack.c.b16 %v649, %v649
      %v666 = vpack.c.b16 %v650, %v650
      %v667 = vpack.c.b16 %v651, %v651
      %v668 = vpack.c.b16 %v652, %v652
      %vm685 = vcmask 519168
      %686 = vst.msk [vmem:[%s207] sm:$0xf] %vm685, %v653
      %687 = vst.msk [vmem:[%s207 + $0x4] sm:$0xf] %vm685, %v654
      %688 = vst.msk [vmem:[%s207 + $0x8] sm:$0xf] %vm685, %v655
      %689 = vst.msk [vmem:[%s207 + $0xc] sm:$0xf] %vm685, %v656
      %690 = vst.msk [vmem:[%s207 + $0x10] sm:$0xf] %vm685, %v657
      %691 = vst.msk [vmem:[%s207 + $0x14] sm:$0xf] %vm685, %v658
      %692 = vst.msk [vmem:[%s207 + $0x18] sm:$0xf] %vm685, %v659
      %693 = vst.msk [vmem:[%s207 + $0x1c] sm:$0xf] %vm685, %v660
      %694 = vst.msk [vmem:[%s207 + $0x20] sm:$0xf] %vm685, %v661
      %695 = vst.msk [vmem:[%s207 + $0x24] sm:$0xf] %vm685, %v662
      %696 = vst.msk [vmem:[%s207 + $0x28] sm:$0xf] %vm685, %v663
      %697 = vst.msk [vmem:[%s207 + $0x2c] sm:$0xf] %vm685, %v664
      %698 = vst.msk [vmem:[%s207 + $0x30] sm:$0xf] %vm685, %v665
      %699 = vst.msk [vmem:[%s207 + $0x34] sm:$0xf] %vm685, %v666
      %700 = vst.msk [vmem:[%s207 + $0x38] sm:$0xf] %vm685, %v667
      %701 = vst.msk [vmem:[%s207 + $0x3c] sm:$0xf] %vm685, %v668
      %s702 = smul.u32 16, %s16
      %p703 = scmp.lt.s32.totalorder %s702, 63
      %s704 = scalar_select %p703, %s702, 63
      %s705 = smul.addr %s704, 4
      %s706 = scalar_lea.vmem %s3, %s705
      %s707 = smul.u32 16, %s16
      %p708 = scmp.lt.s32.totalorder %s707, 63
      %s709 = scalar_select %p708, %s707, 63
      %s710 = smul.addr %s709, 8
      %s711 = scalar_lea.vmem %s4, %s710
      // Predicated region
      $region33: #{tpu_custom_call.1} parent=31 // pred_check
        %p712 = pneg %p102
      $region34: #{tpu_custom_call.1} parent=31 // pred_check_branch
        %714 = sbr.rel (%p712) target = $region36
      $region35: #{tpu_custom_call.1} parent=31 // pred_region
        %s715 = smul.u32 16, %s16
      $region36: #{tpu_custom_call.1} parent=31 // pred_fallthru
        _
      // Predicated region
      $region37: #{tpu_custom_call.1} parent=31 // pred_check
        %p716 = pneg %p128
      $region38: #{tpu_custom_call.1} parent=31 // pred_check_branch
        %718 = sbr.rel (%p716) target = $region40
      $region39: #{tpu_custom_call.1} parent=31 // pred_region
        %s719 = smul.u32 16, %s16
      $region40: #{tpu_custom_call.1} parent=31 // pred_fallthru
        _
    $region32: #{tpu_custom_call.1} parent=5 // pred_fallthru
      _
    %p720 = scmp.le.s32.totalorder 2, %s11
    // Predicated region
    $region41: #{tpu_custom_call.1} parent=5 // pred_check
      %p721 = pneg %p720
    $region42: #{tpu_custom_call.1} parent=5 // pred_check_branch
      %723 = sbr.rel (%p721) target = $region44
    $region43: #{tpu_custom_call.1} parent=5 // pred_region
      %s724 = ssub.s32 %s11, 2
      // Predicated region
      $region45: #{tpu_custom_call.1} parent=43 // pred_check
        %p725 = pneg %p108
      $region46: #{tpu_custom_call.1} parent=43 // pred_check_branch
        %727 = sbr.rel (%p725) target = $region48
      $region47: #{tpu_custom_call.1} parent=43 // pred_region
        %s728 = smul.u32 16, %s17
        %p729 = scmp.lt.s32.totalorder %s728, 63
        %s730 = scalar_select %p729, %s728, 63
        %s731 = smul.addr %s730, 4
        %s732 = scalar_lea.vmem %s3, %s731
      $region48: #{tpu_custom_call.1} parent=43 // pred_fallthru
        _
      // Predicated region
      $region49: #{tpu_custom_call.1} parent=43 // pred_check
        %p733 = pneg %p134
      $region50: #{tpu_custom_call.1} parent=43 // pred_check_branch
        %735 = sbr.rel (%p733) target = $region52
      $region51: #{tpu_custom_call.1} parent=43 // pred_region
        %s736 = smul.u32 16, %s17
        %p737 = scmp.lt.s32.totalorder %s736, 63
        %s738 = scalar_select %p737, %s736, 63
        %s739 = smul.addr %s738, 8
        %s740 = scalar_lea.vmem %s4, %s739
      $region52: #{tpu_custom_call.1} parent=43 // pred_fallthru
        _
    $region44: #{tpu_custom_call.1} parent=5 // pred_fallthru
      _
  $region6: #{tpu_custom_call.1} parent=0 // loop_footer
    %s15 = sadd.s32 1, %s11
  $region7: #{tpu_custom_call.1} parent=0 // loop_footer_branch
    %10 = sbr.rel target = $region3
  $region8: #{tpu_custom_call.1} parent=0 // loop_exit
    _

</llo_original>
